<compile_context>
chip_gen: v7x
topology: tpu7x:2x2x1
jax: 0.10.0
libtpu: 0.0.40
codegen_flags: <defaults>
</compile_context>

<pallas_src>
import math
import jax
import jax.numpy as jnp
from jax.experimental import pallas as pl
from jax.experimental.pallas import tpu as pltpu

_SQRT2 = math.sqrt(2.0)
_TILE_ALIGN = 16  # bf16 packs 16 rows per sublane tile; keep batch tiles 16-aligned


def _round_up(x, m):
    return ((x + m - 1) // m) * m


def _num_tensorcores() -> int:
    """Best-effort TensorCores-per-chip count (2 on v7x/megacore, else 1)."""
    try:
        info = pltpu.get_tpu_info()
    except Exception:
        return 1
    for attr in ("num_cores", "tensorcore_count", "num_tensorcores",
                 "cores_per_chip", "core_count"):
        n = getattr(info, attr, None)
        if isinstance(n, int) and 1 <= n <= 8:
            return n
    return 1


def _choose_batch_tile(B, batch_tile, n_tc):
    """Pick a batch tile: big enough to amortize per-grid-step overhead and
    hit the HBM roofline, small enough that megacore chips get >=2 tiles."""
    if B <= batch_tile and n_tc <= 1:
        return B  # one tile covering the whole batch
    tb = _round_up(pl.cdiv(B, n_tc), _TILE_ALIGN) if n_tc > 1 else batch_tile
    tb = max(min(tb, batch_tile), _TILE_ALIGN)
    if tb >= B:
        return B
    return tb


def _simplenet_kernel(x_ref, *refs):
    """Fused forward pass.  refs = (*weight_refs, out_ref).

    sqrt(2) is pre-folded into the non-final weights, so hidden layers are
    just matmul + relu.  Depth is static, so the Python loop unrolls at
    trace time and every intermediate stays in vregs/VMEM.  Matmuls run in
    the streaming dtype (bf16) on the MXU with f32 accumulation.
    """
    w_refs = refs[:-1]
    o_ref = refs[-1]
    h = x_ref[...]
    for w_ref in w_refs[:-1]:
        h = jnp.dot(h, w_ref[...], preferred_element_type=jnp.float32)
        h = jnp.maximum(h, 0.0).astype(x_ref.dtype)
    o_ref[...] = jnp.dot(
        h, w_refs[-1][...], preferred_element_type=jnp.float32
    ).astype(o_ref.dtype)


def simplenet_forward(x, params, *, batch_tile=2048, use_bf16=True):
    """Forward pass of SimpleNet (bias-free MLP with relu*sqrt2 activations).

    x:      [B, 784]
    params: list of [in, out] weight matrices (initial, hidden..., final),
            i.e. transposed relative to nn.Linear.weight.
    """
    B, Fin = x.shape

    # Fold the sqrt(2) scale into every non-final weight (sqrt2 > 0 commutes
    # with relu), removing one full-block VPU multiply per hidden layer.
    prepped = [w * _SQRT2 for w in params[:-1]] + [params[-1]]

    # bf16 operands: halve HBM traffic on the streaming input and avoid
    # multi-pass f32 MXU emulation; accumulation remains f32.
    if use_bf16:
        x = x.astype(jnp.bfloat16)
        prepped = [w.astype(jnp.bfloat16) for w in prepped]

    n_tc = _num_tensorcores()
    tb = _choose_batch_tile(B, batch_tile, n_tc)
    grid = (pl.cdiv(B, tb),)

    # x is batch-tiled; weights stay VMEM-resident across the whole grid
    # (index_map always returns block (0, 0)); only the (B, 1) result is
    # ever written back to HBM.
    in_specs = [pl.BlockSpec((tb, Fin), lambda i: (i, 0))]
    for w in prepped:
        in_specs.append(pl.BlockSpec(w.shape, lambda i: (0, 0)))
    out_specs = pl.BlockSpec((tb, 1), lambda i: (i, 0))

    # Raise the scoped-VMEM limit only if the chosen tile actually needs it,
    # and cap it so v7x (64 MiB physical per TC) keeps pipelining headroom.
    vmem_est = 2 * tb * Fin * x.dtype.itemsize                      # x, double-buffered
    vmem_est += sum(2 * w.size * w.dtype.itemsize for w in prepped)  # resident weights
    vmem_est += 2 * tb * 4                                           # output blocks
    cp_kwargs = dict(dimension_semantics=("parallel",))
    if vmem_est > 28 * 1024 * 1024:
        cp_kwargs["vmem_limit_bytes"] = int(
            min(vmem_est * 5 // 4 + (4 << 20), 60 * 1024 * 1024))

    return pl.pallas_call(
        _simplenet_kernel,
        out_shape=jax.ShapeDtypeStruct((B, 1), jnp.float32),
        grid=grid,
        in_specs=in_specs,
        out_specs=out_specs,
        compiler_params=pltpu.CompilerParams(**cp_kwargs),
    )(x, *prepped)


def init_simplenet_params(key, depth, width):
    """Deterministic init mimicking nn.Linear default (uniform +-1/sqrt(fan_in)).

    Returns weights already transposed to [in, out] layout.
    """
    params = []
    dims = [(784, width)] + [(width, width)] * (depth - 2) + [(width, 1)]
    keys = jax.random.split(key, len(dims))
    for k, (fan_in, fan_out) in zip(keys, dims):
        bound = 1.0 / math.sqrt(fan_in)
        w = jax.random.uniform(
            k, (fan_in, fan_out), dtype=jnp.float32, minval=-bound, maxval=bound
        )
        params.append(w)
    return params


def _reference_forward(x, params):
    """Pure-f32 reference matching the PyTorch module's math exactly."""
    h = x
    for w in params[:-1]:
        h = jnp.maximum(h @ w, 0.0) * _SQRT2
    return h @ params[-1]


if __name__ == "__main__":
    depth = 4   # initial + 2 hidden + final (bias=False everywhere)
    width = 32

    key = jax.random.PRNGKey(0)
    k_x, k_p, k_big = jax.random.split(key, 3)
    params = init_simplenet_params(k_p, depth, width)

    # Small batch: single fused tile (grid of 1 on single-TC chips).
    batch = 8
    x = jax.random.normal(k_x, (batch, 784), dtype=jnp.float32)
    out = jax.block_until_ready(simplenet_forward(x, params))
    assert out.shape == (batch, 1), out.shape
    ref = _reference_forward(x, params)
    # bf16 operands + sqrt2 folding => relaxed tolerance vs. the f32 reference.
    assert jnp.allclose(out, ref, atol=5e-2, rtol=5e-2), float(
        jnp.max(jnp.abs(out - ref)))

    # Batch-tiled path: default batch_tile=2048 -> >=2 grid tiles of 2048,
    # weights resident across the grid, batch axis marked "parallel".
    big_batch = 4096
    x_big = jax.random.normal(k_big, (big_batch, 784), dtype=jnp.float32)
    out_big = jax.block_until_ready(simplenet_forward(x_big, params))
    assert out_big.shape == (big_batch, 1), out_big.shape
    ref_big = _reference_forward(x_big, params)
    assert jnp.allclose(out_big, ref_big, atol=5e-2, rtol=5e-2), float(
        jnp.max(jnp.abs(out_big - ref_big)))

    print("KERNEL_OK")
</pallas_src>

<mosaic_0001>
module attributes {stable_mosaic.version = 11 : i64} {
  func.func @_simplenet_kernel(%arg0: i32, %arg1: memref<8x784xbf16, #tpu.memory_space<vmem>>, %arg2: memref<784x32xbf16, #tpu.memory_space<vmem>>, %arg3: memref<32x32xbf16, #tpu.memory_space<vmem>>, %arg4: memref<32x32xbf16, #tpu.memory_space<vmem>>, %arg5: memref<32x1xbf16, #tpu.memory_space<vmem>>, %arg6: memref<8x1xf32, #tpu.memory_space<vmem>>) attributes {dimension_semantics = [#tpu.dimension_semantics<parallel>], iteration_bounds = array<i64: 1>, scalar_prefetch = 0 : i64, scratch_operands = 0 : i64, tpu.core_type = #tpu.core_type<tc>, window_params = [{transform_indices = @transform_0, window_bounds = array<i64: 8, 784>}, {pipeline_mode = #tpu.pipeline_mode<synchronous>, transform_indices = @transform_1, window_bounds = array<i64: 784, 32>}, {pipeline_mode = #tpu.pipeline_mode<synchronous>, transform_indices = @transform_2, window_bounds = array<i64: 32, 32>}, {pipeline_mode = #tpu.pipeline_mode<synchronous>, transform_indices = @transform_3, window_bounds = array<i64: 32, 32>}, {pipeline_mode = #tpu.pipeline_mode<synchronous>, transform_indices = @transform_4, window_bounds = array<i64: 32, 1>}, {transform_indices = @transform_5, window_bounds = array<i64: 8, 1>}]} {
    %c0 = arith.constant 0 : index
    %c0_0 = arith.constant 0 : index
    %0 = vector.load %arg1[%c0, %c0_0] : memref<8x784xbf16, #tpu.memory_space<vmem>>, vector<8x784xbf16>
    %c0_1 = arith.constant 0 : index
    %c0_2 = arith.constant 0 : index
    %1 = vector.load %arg2[%c0_1, %c0_2] : memref<784x32xbf16, #tpu.memory_space<vmem>>, vector<784x32xbf16>
    %cst = arith.constant dense<0.000000e+00> : vector<8x32xf32>
    %2 = tpu.matmul %0, %1, %cst {dimension_numbers = #tpu.dot_dimension_numbers<[1], [0], [0], [1], [0, 0, 1, 1], [], []>} : vector<8x784xbf16>, vector<784x32xbf16>, vector<8x32xf32> -> vector<8x32xf32>
    %cst_3 = arith.constant 0.000000e+00 : f32
    %3 = vector.broadcast %cst_3 : f32 to vector<8x32xf32>
    %4 = arith.maximumf %2, %3 : vector<8x32xf32>
    %5 = arith.truncf %4 : vector<8x32xf32> to vector<8x32xbf16>
    %c0_4 = arith.constant 0 : index
    %c0_5 = arith.constant 0 : index
    %6 = vector.load %arg3[%c0_4, %c0_5] : memref<32x32xbf16, #tpu.memory_space<vmem>>, vector<32x32xbf16>
    %cst_6 = arith.constant dense<0.000000e+00> : vector<8x32xf32>
    %7 = tpu.matmul %5, %6, %cst_6 {dimension_numbers = #tpu.dot_dimension_numbers<[1], [0], [0], [1], [0, 0, 1, 1], [], []>} : vector<8x32xbf16>, vector<32x32xbf16>, vector<8x32xf32> -> vector<8x32xf32>
    %cst_7 = arith.constant 0.000000e+00 : f32
    %8 = vector.broadcast %cst_7 : f32 to vector<8x32xf32>
    %9 = arith.maximumf %7, %8 : vector<8x32xf32>
    %10 = arith.truncf %9 : vector<8x32xf32> to vector<8x32xbf16>
    %c0_8 = arith.constant 0 : index
    %c0_9 = arith.constant 0 : index
    %11 = vector.load %arg4[%c0_8, %c0_9] : memref<32x32xbf16, #tpu.memory_space<vmem>>, vector<32x32xbf16>
    %cst_10 = arith.constant dense<0.000000e+00> : vector<8x32xf32>
    %12 = tpu.matmul %10, %11, %cst_10 {dimension_numbers = #tpu.dot_dimension_numbers<[1], [0], [0], [1], [0, 0, 1, 1], [], []>} : vector<8x32xbf16>, vector<32x32xbf16>, vector<8x32xf32> -> vector<8x32xf32>
    %cst_11 = arith.constant 0.000000e+00 : f32
    %13 = vector.broadcast %cst_11 : f32 to vector<8x32xf32>
    %14 = arith.maximumf %12, %13 : vector<8x32xf32>
    %15 = arith.truncf %14 : vector<8x32xf32> to vector<8x32xbf16>
    %c0_12 = arith.constant 0 : index
    %c0_13 = arith.constant 0 : index
    %16 = vector.load %arg5[%c0_12, %c0_13] : memref<32x1xbf16, #tpu.memory_space<vmem>>, vector<32x1xbf16>
    %cst_14 = arith.constant dense<0.000000e+00> : vector<8x1xf32>
    %17 = tpu.matmul %15, %16, %cst_14 {dimension_numbers = #tpu.dot_dimension_numbers<[1], [0], [0], [1], [0, 0, 1, 1], [], []>} : vector<8x32xbf16>, vector<32x1xbf16>, vector<8x1xf32> -> vector<8x1xf32>
    %c0_15 = arith.constant 0 : index
    %c0_16 = arith.constant 0 : index
    %18 = vector.load %arg6[%c0_15, %c0_16] : memref<8x1xf32, #tpu.memory_space<vmem>>, vector<8x1xf32>
    tpu.vector_store %arg6[%c0_15, %c0_16], %17 {strides = array<i32>} : memref<8x1xf32, #tpu.memory_space<vmem>>, vector<8x1xf32>,
    return
  }
  func.func @transform_0(%arg0: i32) -> (i32, i32) {
    %c0_i32 = arith.constant 0 : i32
    %c0_i32_0 = arith.constant 0 : i32
    return %arg0, %c0_i32 : i32, i32
  }
  func.func @transform_1(%arg0: i32) -> (i32, i32) {
    %c0_i32 = arith.constant 0 : i32
    %c0_i32_0 = arith.constant 0 : i32
    %c0_i32_1 = arith.constant 0 : i32
    return %c0_i32, %c0_i32_0 : i32, i32
  }
  func.func @transform_2(%arg0: i32) -> (i32, i32) {
    %c0_i32 = arith.constant 0 : i32
    %c0_i32_0 = arith.constant 0 : i32
    %c0_i32_1 = arith.constant 0 : i32
    return %c0_i32, %c0_i32_0 : i32, i32
  }
  func.func @transform_3(%arg0: i32) -> (i32, i32) {
    %c0_i32 = arith.constant 0 : i32
    %c0_i32_0 = arith.constant 0 : i32
    %c0_i32_1 = arith.constant 0 : i32
    return %c0_i32, %c0_i32_0 : i32, i32
  }
  func.func @transform_4(%arg0: i32) -> (i32, i32) {
    %c0_i32 = arith.constant 0 : i32
    %c0_i32_0 = arith.constant 0 : i32
    %c0_i32_1 = arith.constant 0 : i32
    return %c0_i32, %c0_i32_0 : i32, i32
  }
  func.func @transform_5(%arg0: i32) -> (i32, i32) {
    %c0_i32 = arith.constant 0 : i32
    %c0_i32_0 = arith.constant 0 : i32
    return %arg0, %c0_i32 : i32, i32
  }
}

</mosaic_0001>

<llo_original>
// kernel: tpu_custom_call.1
$region0: #{tpu_custom_call.1}
  #allocation0 [shape = 'u32[]', space=smem, size = 0x4, offset = 0x4, fixed_abs, tag = 'smem constant byte address 0x4 - core index']
  #allocation1 [shape = 'u32[144,128]{1,0:T(1,128)}', space=vmem, size = 0x12000, scoped, tag = 'internal scratch']
  %s0 = inlined_call_operand.vmem [shape: bf16[8,784], index: 0, kind: input, shape index: {}]
  %s1 = inlined_call_operand.vmem [shape: bf16[784,32], index: 1, kind: input, shape index: {}]
  %s2 = inlined_call_operand.vmem [shape: bf16[32,32], index: 2, kind: input, shape index: {}]
  %s3 = inlined_call_operand.vmem [shape: bf16[32,32], index: 3, kind: input, shape index: {}]
  %s4 = inlined_call_operand.vmem [shape: bf16[32,1], index: 4, kind: input, shape index: {}]
  %s5 = inlined_call_operand.vmem [shape: f32[8,1], index: 5, kind: output, shape index: {}]
  %s6 = sld [smem:[#allocation0]]
  $region30: #{tpu_custom_call.1} parent=0
    _
  %s8 = ssub.s32 1, %s6
  %s9 = scalar_select 0, %s8, %s6
  // Predicated region
  $region2: #{tpu_custom_call.1} parent=0 // pred_check
    _
  $region3: #{tpu_custom_call.1} parent=0 // pred_check_branch
    %11 = sbr.rel (0) target = $region5
  $region4: #{tpu_custom_call.1} parent=0 // pred_region
    _
  $region5: #{tpu_custom_call.1} parent=0 // pred_fallthru
    _
  // Predicated region
  $region6: #{tpu_custom_call.1} parent=0 // pred_check
    _
  $region7: #{tpu_custom_call.1} parent=0 // pred_check_branch
    %13 = sbr.rel (0) target = $region9
  $region8: #{tpu_custom_call.1} parent=0 // pred_region
    _
  $region9: #{tpu_custom_call.1} parent=0 // pred_fallthru
    _
  // Predicated region
  $region10: #{tpu_custom_call.1} parent=0 // pred_check
    _
  $region11: #{tpu_custom_call.1} parent=0 // pred_check_branch
    %15 = sbr.rel (0) target = $region13
  $region12: #{tpu_custom_call.1} parent=0 // pred_region
    _
  $region13: #{tpu_custom_call.1} parent=0 // pred_fallthru
    _
  // Predicated region
  $region14: #{tpu_custom_call.1} parent=0 // pred_check
    _
  $region15: #{tpu_custom_call.1} parent=0 // pred_check_branch
    %17 = sbr.rel (0) target = $region17
  $region16: #{tpu_custom_call.1} parent=0 // pred_region
    _
  $region17: #{tpu_custom_call.1} parent=0 // pred_fallthru
    _
  // Predicated region
  $region18: #{tpu_custom_call.1} parent=0 // pred_check
    _
  $region19: #{tpu_custom_call.1} parent=0 // pred_check_branch
    %19 = sbr.rel (0) target = $region21
  $region20: #{tpu_custom_call.1} parent=0 // pred_region
    _
  $region21: #{tpu_custom_call.1} parent=0 // pred_fallthru
    _
  %v21 = vld [vmem:[%s0] sm:$0xff]
  %v22 = vld [vmem:[%s0 + $0x8] sm:$0xff]
  %v23 = vld [vmem:[%s0 + $0x10] sm:$0xff]
  %v24 = vld [vmem:[%s0 + $0x18] sm:$0xf]
  %v25 = vld [vmem:[%s1] sm:$0xf]
  %v26 = vld [vmem:[%s1 + $0x4] sm:$0xf]
  %v27 = vld [vmem:[%s1 + $0x8] sm:$0xf]
  %v28 = vld [vmem:[%s1 + $0xc] sm:$0xf]
  %v29 = vld [vmem:[%s1 + $0x10] sm:$0xf]
  %v30 = vld [vmem:[%s1 + $0x14] sm:$0xf]
  %v31 = vld [vmem:[%s1 + $0x18] sm:$0xf]
  %v32 = vld [vmem:[%s1 + $0x1c] sm:$0xf]
  %v33 = vld [vmem:[%s1 + $0x20] sm:$0xf]
  %v34 = vld [vmem:[%s1 + $0x24] sm:$0xf]
  %v35 = vld [vmem:[%s1 + $0x28] sm:$0xf]
  %v36 = vld [vmem:[%s1 + $0x2c] sm:$0xf]
  %v37 = vld [vmem:[%s1 + $0x30] sm:$0xf]
  %v38 = vld [vmem:[%s1 + $0x34] sm:$0xf]
  %v39 = vld [vmem:[%s1 + $0x38] sm:$0xf]
  %v40 = vld [vmem:[%s1 + $0x3c] sm:$0xf]
  %v41 = vld [vmem:[%s1 + $0x40] sm:$0xf]
  %v42 = vld [vmem:[%s1 + $0x44] sm:$0xf]
  %v43 = vld [vmem:[%s1 + $0x48] sm:$0xf]
  %v44 = vld [vmem:[%s1 + $0x4c] sm:$0xf]
  %v45 = vld [vmem:[%s1 + $0x50] sm:$0xf]
  %v46 = vld [vmem:[%s1 + $0x54] sm:$0xf]
  %v47 = vld [vmem:[%s1 + $0x58] sm:$0xf]
  %v48 = vld [vmem:[%s1 + $0x5c] sm:$0xf]
  %v49 = vld [vmem:[%s1 + $0x60] sm:$0xf]
  %v50 = vld [vmem:[%s1 + $0x64] sm:$0xf]
  %v51 = vld [vmem:[%s1 + $0x68] sm:$0xf]
  %v52 = vld [vmem:[%s1 + $0x6c] sm:$0xf]
  %v53 = vld [vmem:[%s1 + $0x70] sm:$0xf]
  %v54 = vld [vmem:[%s1 + $0x74] sm:$0xf]
  %v55 = vld [vmem:[%s1 + $0x78] sm:$0xf]
  %v56 = vld [vmem:[%s1 + $0x7c] sm:$0xf]
  %v57 = vld [vmem:[%s1 + $0x80] sm:$0xf]
  %v58 = vld [vmem:[%s1 + $0x84] sm:$0xf]
  %v59 = vld [vmem:[%s1 + $0x88] sm:$0xf]
  %v60 = vld [vmem:[%s1 + $0x8c] sm:$0xf]
  %v61 = vld [vmem:[%s1 + $0x90] sm:$0xf]
  %v62 = vld [vmem:[%s1 + $0x94] sm:$0xf]
  %v63 = vld [vmem:[%s1 + $0x98] sm:$0xf]
  %v64 = vld [vmem:[%s1 + $0x9c] sm:$0xf]
  %v65 = vld [vmem:[%s1 + $0xa0] sm:$0xf]
  %v66 = vld [vmem:[%s1 + $0xa4] sm:$0xf]
  %v67 = vld [vmem:[%s1 + $0xa8] sm:$0xf]
  %v68 = vld [vmem:[%s1 + $0xac] sm:$0xf]
  %v69 = vld [vmem:[%s1 + $0xb0] sm:$0xf]
  %v70 = vld [vmem:[%s1 + $0xb4] sm:$0xf]
  %v71 = vld [vmem:[%s1 + $0xb8] sm:$0xf]
  %v72 = vld [vmem:[%s1 + $0xbc] sm:$0xf]
  %v73 = vld [vmem:[%s1 + $0xc0] sm:$0xf]
  %v74 = vld [vmem:[%s1 + $0xc4] sm:$0xf]
  %v75 = vld [vmem:[%s1 + $0xc8] sm:$0xf]
  %v76 = vld [vmem:[%s1 + $0xcc] sm:$0xf]
  %v77 = vld [vmem:[%s1 + $0xd0] sm:$0xf]
  %v78 = vld [vmem:[%s1 + $0xd4] sm:$0xf]
  %v79 = vld [vmem:[%s1 + $0xd8] sm:$0xf]
  %v80 = vld [vmem:[%s1 + $0xdc] sm:$0xf]
  %v81 = vld [vmem:[%s1 + $0xe0] sm:$0xf]
  %v82 = vld [vmem:[%s1 + $0xe4] sm:$0xf]
  %v83 = vld [vmem:[%s1 + $0xe8] sm:$0xf]
  %v84 = vld [vmem:[%s1 + $0xec] sm:$0xf]
  %v85 = vld [vmem:[%s1 + $0xf0] sm:$0xf]
  %v86 = vld [vmem:[%s1 + $0xf4] sm:$0xf]
  %v87 = vld [vmem:[%s1 + $0xf8] sm:$0xf]
  %v88 = vld [vmem:[%s1 + $0xfc] sm:$0xf]
  %v89 = vld [vmem:[%s1 + $0x100] sm:$0xf]
  %v90 = vld [vmem:[%s1 + $0x104] sm:$0xf]
  %v91 = vld [vmem:[%s1 + $0x108] sm:$0xf]
  %v92 = vld [vmem:[%s1 + $0x10c] sm:$0xf]
  %v93 = vld [vmem:[%s1 + $0x110] sm:$0xf]
  %v94 = vld [vmem:[%s1 + $0x114] sm:$0xf]
  %v95 = vld [vmem:[%s1 + $0x118] sm:$0xf]
  %v96 = vld [vmem:[%s1 + $0x11c] sm:$0xf]
  %v97 = vld [vmem:[%s1 + $0x120] sm:$0xf]
  %v98 = vld [vmem:[%s1 + $0x124] sm:$0xf]
  %v99 = vld [vmem:[%s1 + $0x128] sm:$0xf]
  %v100 = vld [vmem:[%s1 + $0x12c] sm:$0xf]
  %v101 = vld [vmem:[%s1 + $0x130] sm:$0xf]
  %v102 = vld [vmem:[%s1 + $0x134] sm:$0xf]
  %v103 = vld [vmem:[%s1 + $0x138] sm:$0xf]
  %v104 = vld [vmem:[%s1 + $0x13c] sm:$0xf]
  %v105 = vld [vmem:[%s1 + $0x140] sm:$0xf]
  %v106 = vld [vmem:[%s1 + $0x144] sm:$0xf]
  %v107 = vld [vmem:[%s1 + $0x148] sm:$0xf]
  %v108 = vld [vmem:[%s1 + $0x14c] sm:$0xf]
  %v109 = vld [vmem:[%s1 + $0x150] sm:$0xf]
  %v110 = vld [vmem:[%s1 + $0x154] sm:$0xf]
  %v111 = vld [vmem:[%s1 + $0x158] sm:$0xf]
  %v112 = vld [vmem:[%s1 + $0x15c] sm:$0xf]
  %v113 = vld [vmem:[%s1 + $0x160] sm:$0xf]
  %v114 = vld [vmem:[%s1 + $0x164] sm:$0xf]
  %v115 = vld [vmem:[%s1 + $0x168] sm:$0xf]
  %v116 = vld [vmem:[%s1 + $0x16c] sm:$0xf]
  %v117 = vld [vmem:[%s1 + $0x170] sm:$0xf]
  %v118 = vld [vmem:[%s1 + $0x174] sm:$0xf]
  %v119 = vld [vmem:[%s1 + $0x178] sm:$0xf]
  %v120 = vld [vmem:[%s1 + $0x17c] sm:$0xf]
  %v121 = vld [vmem:[%s1 + $0x180] sm:$0xf]
  %v122 = vld [vmem:[%s1 + $0x184] sm:$0xf]
  %v127 = vunpack.c.l.b16 %v21
  %v128 = vunpack.c.h.b16 %v21
  %v129 = vunpack.c.l.b16 %v22
  %v130 = vunpack.c.h.b16 %v22
  %v131 = vunpack.c.l.b16 %v23
  %v132 = vunpack.c.h.b16 %v23
  %v133 = vunpack.c.l.b16 %v24
  %v134 = vpack.c.b16 %v127, %v127
  %v135 = vpack.c.b16 %v128, %v128
  %v136 = vpack.c.b16 %v129, %v129
  %v137 = vpack.c.b16 %v130, %v130
  %v138 = vpack.c.b16 %v131, %v131
  %v139 = vpack.c.b16 %v132, %v132
  %v140 = vpack.c.b16 %v133, %v133
  %v245 = vunpack.c.l.b16 %v25
  %v246 = vunpack.c.l.b16 %v26
  %v247 = vunpack.c.l.b16 %v27
  %v248 = vunpack.c.l.b16 %v28
  %v249 = vunpack.c.l.b16 %v29
  %v250 = vunpack.c.l.b16 %v30
  %v251 = vunpack.c.l.b16 %v31
  %v252 = vunpack.c.l.b16 %v32
  %v253 = vunpack.c.l.b16 %v33
  %v254 = vunpack.c.l.b16 %v34
  %v255 = vunpack.c.l.b16 %v35
  %v256 = vunpack.c.l.b16 %v36
  %v257 = vunpack.c.l.b16 %v37
  %v258 = vunpack.c.l.b16 %v38
  %v259 = vunpack.c.l.b16 %v39
  %v260 = vunpack.c.l.b16 %v40
  %v261 = vunpack.c.l.b16 %v41
  %v262 = vunpack.c.l.b16 %v42
  %v263 = vunpack.c.l.b16 %v43
  %v264 = vunpack.c.l.b16 %v44
  %v265 = vunpack.c.l.b16 %v45
  %v266 = vunpack.c.l.b16 %v46
  %v267 = vunpack.c.l.b16 %v47
  %v268 = vunpack.c.l.b16 %v48
  %v269 = vunpack.c.l.b16 %v49
  %v270 = vunpack.c.l.b16 %v50
  %v271 = vunpack.c.l.b16 %v51
  %v272 = vunpack.c.l.b16 %v52
  %v273 = vunpack.c.l.b16 %v53
  %v274 = vunpack.c.l.b16 %v54
  %v275 = vunpack.c.l.b16 %v55
  %v276 = vunpack.c.l.b16 %v56
  %v277 = vunpack.c.l.b16 %v57
  %v278 = vunpack.c.l.b16 %v58
  %v279 = vunpack.c.l.b16 %v59
  %v280 = vunpack.c.l.b16 %v60
  %v281 = vunpack.c.l.b16 %v61
  %v282 = vunpack.c.l.b16 %v62
  %v283 = vunpack.c.l.b16 %v63
  %v284 = vunpack.c.l.b16 %v64
  %v285 = vunpack.c.l.b16 %v65
  %v286 = vunpack.c.l.b16 %v66
  %v287 = vunpack.c.l.b16 %v67
  %v288 = vunpack.c.l.b16 %v68
  %v289 = vunpack.c.l.b16 %v69
  %v290 = vunpack.c.l.b16 %v70
  %v291 = vunpack.c.l.b16 %v71
  %v292 = vunpack.c.l.b16 %v72
  %v293 = vunpack.c.l.b16 %v73
  %v294 = vunpack.c.l.b16 %v74
  %v295 = vunpack.c.l.b16 %v75
  %v296 = vunpack.c.l.b16 %v76
  %v297 = vunpack.c.l.b16 %v77
  %v298 = vunpack.c.l.b16 %v78
  %v299 = vunpack.c.l.b16 %v79
  %v300 = vunpack.c.l.b16 %v80
  %v301 = vunpack.c.l.b16 %v81
  %v302 = vunpack.c.l.b16 %v82
  %v303 = vunpack.c.l.b16 %v83
  %v304 = vunpack.c.l.b16 %v84
  %v305 = vunpack.c.l.b16 %v85
  %v306 = vunpack.c.l.b16 %v86
  %v307 = vunpack.c.l.b16 %v87
  %v308 = vunpack.c.l.b16 %v88
  %v309 = vunpack.c.l.b16 %v89
  %v310 = vunpack.c.l.b16 %v90
  %v311 = vunpack.c.l.b16 %v91
  %v312 = vunpack.c.l.b16 %v92
  %v313 = vunpack.c.l.b16 %v93
  %v314 = vunpack.c.l.b16 %v94
  %v315 = vunpack.c.l.b16 %v95
  %v316 = vunpack.c.l.b16 %v96
  %v317 = vunpack.c.l.b16 %v97
  %v318 = vunpack.c.l.b16 %v98
  %v319 = vunpack.c.l.b16 %v99
  %v320 = vunpack.c.l.b16 %v100
  %v321 = vunpack.c.l.b16 %v101
  %v322 = vunpack.c.l.b16 %v102
  %v323 = vunpack.c.l.b16 %v103
  %v324 = vunpack.c.l.b16 %v104
  %v325 = vunpack.c.l.b16 %v105
  %v326 = vunpack.c.l.b16 %v106
  %v327 = vunpack.c.l.b16 %v107
  %v328 = vunpack.c.l.b16 %v108
  %v329 = vunpack.c.l.b16 %v109
  %v330 = vunpack.c.l.b16 %v110
  %v331 = vunpack.c.l.b16 %v111
  %v332 = vunpack.c.l.b16 %v112
  %v333 = vunpack.c.l.b16 %v113
  %v334 = vunpack.c.l.b16 %v114
  %v335 = vunpack.c.l.b16 %v115
  %v336 = vunpack.c.l.b16 %v116
  %v337 = vunpack.c.l.b16 %v117
  %v338 = vunpack.c.l.b16 %v118
  %v339 = vunpack.c.l.b16 %v119
  %v340 = vunpack.c.l.b16 %v120
  %v341 = vunpack.c.l.b16 %v121
  %v342 = vunpack.c.l.b16 %v122
  %v343 = vpack.c.b16 %v246, %v245
  %v344 = vpack.c.b16 %v248, %v247
  %v345 = vpack.c.b16 %v250, %v249
  %v346 = vpack.c.b16 %v252, %v251
  %v347 = vpack.c.b16 %v254, %v253
  %v348 = vpack.c.b16 %v256, %v255
  %v349 = vpack.c.b16 %v258, %v257
  %v350 = vpack.c.b16 %v260, %v259
  %v351 = vpack.c.b16 %v262, %v261
  %v352 = vpack.c.b16 %v264, %v263
  %v353 = vpack.c.b16 %v266, %v265
  %v354 = vpack.c.b16 %v268, %v267
  %v355 = vpack.c.b16 %v270, %v269
  %v356 = vpack.c.b16 %v272, %v271
  %v357 = vpack.c.b16 %v274, %v273
  %v358 = vpack.c.b16 %v276, %v275
  %v359 = vpack.c.b16 %v278, %v277
  %v360 = vpack.c.b16 %v280, %v279
  %v361 = vpack.c.b16 %v282, %v281
  %v362 = vpack.c.b16 %v284, %v283
  %v363 = vpack.c.b16 %v286, %v285
  %v364 = vpack.c.b16 %v288, %v287
  %v365 = vpack.c.b16 %v290, %v289
  %v366 = vpack.c.b16 %v292, %v291
  %v367 = vpack.c.b16 %v294, %v293
  %v368 = vpack.c.b16 %v296, %v295
  %v369 = vpack.c.b16 %v298, %v297
  %v370 = vpack.c.b16 %v300, %v299
  %v371 = vpack.c.b16 %v302, %v301
  %v372 = vpack.c.b16 %v304, %v303
  %v373 = vpack.c.b16 %v306, %v305
  %v374 = vpack.c.b16 %v308, %v307
  %v375 = vpack.c.b16 %v310, %v309
  %v376 = vpack.c.b16 %v312, %v311
  %v377 = vpack.c.b16 %v314, %v313
  %v378 = vpack.c.b16 %v316, %v315
  %v379 = vpack.c.b16 %v318, %v317
  %v380 = vpack.c.b16 %v320, %v319
  %v381 = vpack.c.b16 %v322, %v321
  %v382 = vpack.c.b16 %v324, %v323
  %v383 = vpack.c.b16 %v326, %v325
  %v384 = vpack.c.b16 %v328, %v327
  %v385 = vpack.c.b16 %v330, %v329
  %v386 = vpack.c.b16 %v332, %v331
  %v387 = vpack.c.b16 %v334, %v333
  %v388 = vpack.c.b16 %v336, %v335
  %v389 = vpack.c.b16 %v338, %v337
  %v390 = vpack.c.b16 %v340, %v339
  %v391 = vpack.c.b16 %v342, %v341
  %vm441 = vcmask 130048
  %v443 = vsel %vm441, %v140, 0
  %445 = vmatprep.subr.bf16.mxu0 0
  %446 = vmatpush1.bf16.msra.mxu0 %v343
  %447 = vmatprep.subr.bf16.mxu0 0
  %448 = vmatpush1.bf16.msra.mxu0 %v344
  %449 = vmatprep.subr.bf16.mxu0 0
  %450 = vmatpush1.bf16.msra.mxu0 %v345
  %451 = vmatprep.subr.bf16.mxu0 0
  %452 = vmatpush1.bf16.msra.mxu0 %v346
  %453 = vmatprep.subr.bf16.mxu0 0
  %454 = vmatpush1.bf16.msra.mxu0 %v347
  %455 = vmatprep.subr.bf16.mxu0 0
  %456 = vmatpush1.bf16.msra.mxu0 %v348
  %457 = vmatprep.subr.bf16.mxu0 0
  %458 = vmatpush1.bf16.msra.mxu0 %v349
  %459 = vmatprep.subr.bf16.mxu0 0
  %460 = vmatpush1.bf16.msra.mxu0 %v350
  %461 = vmatprep.subr.bf16.mxu0 0
  %462 = vmatpush1.bf16.msra.mxu0 %v351
  %463 = vmatprep.subr.bf16.mxu0 0
  %464 = vmatpush1.bf16.msra.mxu0 %v352
  %465 = vmatprep.subr.bf16.mxu0 0
  %466 = vmatpush1.bf16.msra.mxu0 %v353
  %467 = vmatprep.subr.bf16.mxu0 0
  %468 = vmatpush1.bf16.msra.mxu0 %v354
  %469 = vmatprep.subr.bf16.mxu0 0
  %470 = vmatpush1.bf16.msra.mxu0 %v355
  %471 = vmatprep.subr.bf16.mxu0 0
  %472 = vmatpush1.bf16.msra.mxu0 %v356
  %473 = vmatprep.subr.bf16.mxu0 0
  %474 = vmatpush1.bf16.msra.mxu0 %v357
  %475 = vmatprep.subr.bf16.mxu0 0
  %476 = vmatpush1.bf16.msra.mxu0 %v358
  %477 = vmatprep.mubr.bf16.mxu0 %v135
  %478 = vmatmul.mubr.bf16.gmra.mrb[0].mxu0 %v134
  %v479 = vpop.f32.mrb[0].mxu0
  %v480 = vadd.f32 0.0, %v479
  %v481 = vpop.f32.mrb[0].mxu0
  %v482 = vpop.f32.mrb[0].mxu0
  %v483 = vpop.f32.mrb[0].mxu0
  %484 = vdwg.mxu0
  %485 = vmatprep.subr.bf16.mxu0 0
  %486 = vmatpush1.bf16.msra.mxu0 %v359
  %487 = vmatprep.subr.bf16.mxu0 0
  %488 = vmatpush1.bf16.msra.mxu0 %v360
  %489 = vmatprep.subr.bf16.mxu0 0
  %490 = vmatpush1.bf16.msra.mxu0 %v361
  %491 = vmatprep.subr.bf16.mxu0 0
  %492 = vmatpush1.bf16.msra.mxu0 %v362
  %493 = vmatprep.subr.bf16.mxu0 0
  %494 = vmatpush1.bf16.msra.mxu0 %v363
  %495 = vmatprep.subr.bf16.mxu0 0
  %496 = vmatpush1.bf16.msra.mxu0 %v364
  %497 = vmatprep.subr.bf16.mxu0 0
  %498 = vmatpush1.bf16.msra.mxu0 %v365
  %499 = vmatprep.subr.bf16.mxu0 0
  %500 = vmatpush1.bf16.msra.mxu0 %v366
  %501 = vmatprep.subr.bf16.mxu0 0
  %502 = vmatpush1.bf16.msra.mxu0 %v367
  %503 = vmatprep.subr.bf16.mxu0 0
  %504 = vmatpush1.bf16.msra.mxu0 %v368
  %505 = vmatprep.subr.bf16.mxu0 0
  %506 = vmatpush1.bf16.msra.mxu0 %v369
  %507 = vmatprep.subr.bf16.mxu0 0
  %508 = vmatpush1.bf16.msra.mxu0 %v370
  %509 = vmatprep.subr.bf16.mxu0 0
  %510 = vmatpush1.bf16.msra.mxu0 %v371
  %511 = vmatprep.subr.bf16.mxu0 0
  %512 = vmatpush1.bf16.msra.mxu0 %v372
  %513 = vmatprep.subr.bf16.mxu0 0
  %514 = vmatpush1.bf16.msra.mxu0 %v373
  %515 = vmatprep.subr.bf16.mxu0 0
  %516 = vmatpush1.bf16.msra.mxu0 %v374
  %517 = vmatprep.mubr.bf16.mxu0 %v137
  %518 = vmatmul.mubr.bf16.gmra.mrb[0].mxu0 %v136
  %v519 = vpop.f32.mrb[0].mxu0
  %v520 = vadd.f32 %v480, %v519
  %v521 = vpop.f32.mrb[0].mxu0
  %v522 = vpop.f32.mrb[0].mxu0
  %v523 = vpop.f32.mrb[0].mxu0
  %524 = vdwg.mxu0
  %525 = vmatprep.subr.bf16.mxu0 0
  %526 = vmatpush1.bf16.msra.mxu0 %v375
  %527 = vmatprep.subr.bf16.mxu0 0
  %528 = vmatpush1.bf16.msra.mxu0 %v376
  %529 = vmatprep.subr.bf16.mxu0 0
  %530 = vmatpush1.bf16.msra.mxu0 %v377
  %531 = vmatprep.subr.bf16.mxu0 0
  %532 = vmatpush1.bf16.msra.mxu0 %v378
  %533 = vmatprep.subr.bf16.mxu0 0
  %534 = vmatpush1.bf16.msra.mxu0 %v379
  %535 = vmatprep.subr.bf16.mxu0 0
  %536 = vmatpush1.bf16.msra.mxu0 %v380
  %537 = vmatprep.subr.bf16.mxu0 0
  %538 = vmatpush1.bf16.msra.mxu0 %v381
  %539 = vmatprep.subr.bf16.mxu0 0
  %540 = vmatpush1.bf16.msra.mxu0 %v382
  %541 = vmatprep.subr.bf16.mxu0 0
  %542 = vmatpush1.bf16.msra.mxu0 %v383
  %543 = vmatprep.subr.bf16.mxu0 0
  %544 = vmatpush1.bf16.msra.mxu0 %v384
  %545 = vmatprep.subr.bf16.mxu0 0
  %546 = vmatpush1.bf16.msra.mxu0 %v385
  %547 = vmatprep.subr.bf16.mxu0 0
  %548 = vmatpush1.bf16.msra.mxu0 %v386
  %549 = vmatprep.subr.bf16.mxu0 0
  %550 = vmatpush1.bf16.msra.mxu0 %v387
  %551 = vmatprep.subr.bf16.mxu0 0
  %552 = vmatpush1.bf16.msra.mxu0 %v388
  %553 = vmatprep.subr.bf16.mxu0 0
  %554 = vmatpush1.bf16.msra.mxu0 %v389
  %555 = vmatprep.subr.bf16.mxu0 0
  %556 = vmatpush1.bf16.msra.mxu0 %v390
  %557 = vmatprep.mubr.bf16.mxu0 %v139
  %558 = vmatmul.mubr.bf16.gmra.mrb[0].mxu0 %v138
  %v559 = vpop.f32.mrb[0].mxu0
  %v560 = vadd.f32 %v520, %v559
  %v561 = vpop.f32.mrb[0].mxu0
  %v562 = vpop.f32.mrb[0].mxu0
  %v563 = vpop.f32.mrb[0].mxu0
  %564 = vdwg.mxu0
  %565 = vmatprep.subr.bf16.mxu0 0
  %566 = vmatpush1.bf16.msra.mxu0 %v391
  %567 = vmatprep.subr.bf16.mxu0 0
  %568 = vmatpush1.bf16.msra.mxu0 0
  %569 = vmatprep.subr.bf16.mxu0 0
  %570 = vmatpush1.bf16.msra.mxu0 0
  %571 = vmatprep.subr.bf16.mxu0 0
  %572 = vmatpush1.bf16.msra.mxu0 0
  %573 = vmatprep.subr.bf16.mxu0 0
  %574 = vmatpush1.bf16.msra.mxu0 0
  %575 = vmatprep.subr.bf16.mxu0 0
  %576 = vmatpush1.bf16.msra.mxu0 0
  %577 = vmatprep.subr.bf16.mxu0 0
  %578 = vmatpush1.bf16.msra.mxu0 0
  %579 = vmatprep.subr.bf16.mxu0 0
  %580 = vmatpush1.bf16.msra.mxu0 0
  %581 = vmatprep.subr.bf16.mxu0 0
  %582 = vmatpush1.bf16.msra.mxu0 0
  %583 = vmatprep.subr.bf16.mxu0 0
  %584 = vmatpush1.bf16.msra.mxu0 0
  %585 = vmatprep.subr.bf16.mxu0 0
  %586 = vmatpush1.bf16.msra.mxu0 0
  %587 = vmatprep.subr.bf16.mxu0 0
  %588 = vmatpush1.bf16.msra.mxu0 0
  %589 = vmatprep.subr.bf16.mxu0 0
  %590 = vmatpush1.bf16.msra.mxu0 0
  %591 = vmatprep.subr.bf16.mxu0 0
  %592 = vmatpush1.bf16.msra.mxu0 0
  %593 = vmatprep.subr.bf16.mxu0 0
  %594 = vmatpush1.bf16.msra.mxu0 0
  %595 = vmatprep.subr.bf16.mxu0 0
  %596 = vmatpush1.bf16.msra.mxu0 0
  %597 = vmatprep.mubr.bf16.mxu0 0
  %598 = vmatmul.mubr.bf16.gmra.mrb[0].mxu0 %v443
  %v599 = vpop.f32.mrb[0].mxu0
  %v600 = vadd.f32 %v560, %v599
  %v601 = vpop.f32.mrb[0].mxu0
  %v602 = vpop.f32.mrb[0].mxu0
  %v603 = vpop.f32.mrb[0].mxu0
  %604 = vdwg.mxu0
  %v605 = vmax.f32 %v600, 0.0
  %v606 = vpack.c.bf16 %v605, %v605
  %v607 = vld [vmem:[%s2] sm:$0xf]
  %v608 = vld [vmem:[%s2 + $0x4] sm:$0xf]
  %v609 = vld [vmem:[%s2 + $0x8] sm:$0xf]
  %v610 = vld [vmem:[%s2 + $0xc] sm:$0xf]
  %v615 = vunpack.c.l.b16 %v607
  %v616 = vunpack.c.l.b16 %v608
  %v617 = vunpack.c.l.b16 %v609
  %v618 = vunpack.c.l.b16 %v610
  %v619 = vpack.c.b16 %v616, %v615
  %v620 = vpack.c.b16 %v618, %v617
  %vm623 = vcmask 261120
  %v625 = vsel %vm623, %v606, 0
  %627 = vmatprep.subr.bf16.mxu0 0
  %628 = vmatpush1.bf16.msra.mxu0 %v619
  %629 = vmatprep.subr.bf16.mxu0 0
  %630 = vmatpush1.bf16.msra.mxu0 %v620
  %631 = vmatprep.subr.bf16.mxu0 0
  %632 = vmatpush1.bf16.msra.mxu0 0
  %633 = vmatprep.subr.bf16.mxu0 0
  %634 = vmatpush1.bf16.msra.mxu0 0
  %635 = vmatprep.subr.bf16.mxu0 0
  %636 = vmatpush1.bf16.msra.mxu0 0
  %637 = vmatprep.subr.bf16.mxu0 0
  %638 = vmatpush1.bf16.msra.mxu0 0
  %639 = vmatprep.subr.bf16.mxu0 0
  %640 = vmatpush1.bf16.msra.mxu0 0
  %641 = vmatprep.subr.bf16.mxu0 0
  %642 = vmatpush1.bf16.msra.mxu0 0
  %643 = vmatprep.subr.bf16.mxu0 0
  %644 = vmatpush1.bf16.msra.mxu0 0
  %645 = vmatprep.subr.bf16.mxu0 0
  %646 = vmatpush1.bf16.msra.mxu0 0
  %647 = vmatprep.subr.bf16.mxu0 0
  %648 = vmatpush1.bf16.msra.mxu0 0
  %649 = vmatprep.subr.bf16.mxu0 0
  %650 = vmatpush1.bf16.msra.mxu0 0
  %651 = vmatprep.subr.bf16.mxu0 0
  %652 = vmatpush1.bf16.msra.mxu0 0
  %653 = vmatprep.subr.bf16.mxu0 0
  %654 = vmatpush1.bf16.msra.mxu0 0
  %655 = vmatprep.subr.bf16.mxu0 0
  %656 = vmatpush1.bf16.msra.mxu0 0
  %657 = vmatprep.subr.bf16.mxu0 0
  %658 = vmatpush1.bf16.msra.mxu0 0
  %659 = vmatprep.mubr.bf16.mxu0 0
  %660 = vmatmul.mubr.bf16.gmra.mrb[0].mxu0 %v625
  %v661 = vpop.f32.mrb[0].mxu0
  %v662 = vadd.f32 0.0, %v661
  %v663 = vpop.f32.mrb[0].mxu0
  %v664 = vpop.f32.mrb[0].mxu0
  %v665 = vpop.f32.mrb[0].mxu0
  %666 = vdwg.mxu0
  %v667 = vmax.f32 %v662, 0.0
  %v668 = vpack.c.bf16 %v667, %v667
  %v669 = vld [vmem:[%s3] sm:$0xf]
  %v670 = vld [vmem:[%s3 + $0x4] sm:$0xf]
  %v671 = vld [vmem:[%s3 + $0x8] sm:$0xf]
  %v672 = vld [vmem:[%s3 + $0xc] sm:$0xf]
  %v677 = vunpack.c.l.b16 %v669
  %v678 = vunpack.c.l.b16 %v670
  %v679 = vunpack.c.l.b16 %v671
  %v680 = vunpack.c.l.b16 %v672
  %v681 = vpack.c.b16 %v678, %v677
  %v682 = vpack.c.b16 %v680, %v679
  %v686 = vsel %vm623, %v668, 0
  %688 = vmatprep.subr.bf16.mxu0 0
  %689 = vmatpush1.bf16.msra.mxu0 %v681
  %690 = vmatprep.subr.bf16.mxu0 0
  %691 = vmatpush1.bf16.msra.mxu0 %v682
  %692 = vmatprep.subr.bf16.mxu0 0
  %693 = vmatpush1.bf16.msra.mxu0 0
  %694 = vmatprep.subr.bf16.mxu0 0
  %695 = vmatpush1.bf16.msra.mxu0 0
  %696 = vmatprep.subr.bf16.mxu0 0
  %697 = vmatpush1.bf16.msra.mxu0 0
  %698 = vmatprep.subr.bf16.mxu0 0
  %699 = vmatpush1.bf16.msra.mxu0 0
  %700 = vmatprep.subr.bf16.mxu0 0
  %701 = vmatpush1.bf16.msra.mxu0 0
  %702 = vmatprep.subr.bf16.mxu0 0
  %703 = vmatpush1.bf16.msra.mxu0 0
  %704 = vmatprep.subr.bf16.mxu0 0
  %705 = vmatpush1.bf16.msra.mxu0 0
  %706 = vmatprep.subr.bf16.mxu0 0
  %707 = vmatpush1.bf16.msra.mxu0 0
  %708 = vmatprep.subr.bf16.mxu0 0
  %709 = vmatpush1.bf16.msra.mxu0 0
  %710 = vmatprep.subr.bf16.mxu0 0
  %711 = vmatpush1.bf16.msra.mxu0 0
  %712 = vmatprep.subr.bf16.mxu0 0
  %713 = vmatpush1.bf16.msra.mxu0 0
  %714 = vmatprep.subr.bf16.mxu0 0
  %715 = vmatpush1.bf16.msra.mxu0 0
  %716 = vmatprep.subr.bf16.mxu0 0
  %717 = vmatpush1.bf16.msra.mxu0 0
  %718 = vmatprep.subr.bf16.mxu0 0
  %719 = vmatpush1.bf16.msra.mxu0 0
  %720 = vmatprep.mubr.bf16.mxu0 0
  %721 = vmatmul.mubr.bf16.gmra.mrb[0].mxu0 %v686
  %v722 = vpop.f32.mrb[0].mxu0
  %v723 = vadd.f32 0.0, %v722
  %v724 = vpop.f32.mrb[0].mxu0
  %v725 = vpop.f32.mrb[0].mxu0
  %v726 = vpop.f32.mrb[0].mxu0
  %727 = vdwg.mxu0
  %v728 = vmax.f32 %v723, 0.0
  %v729 = vpack.c.bf16 %v728, %v728
  %v730 = vld [vmem:[%s4] sm:$0xf]
  %v731 = vld [vmem:[%s4 + $0x4] sm:$0xf]
  %v732 = vld [vmem:[%s4 + $0x8] sm:$0xf]
  %v733 = vld [vmem:[%s4 + $0xc] sm:$0xf]
  %v738 = vunpack.c.l.b16 %v730
  %v739 = vunpack.c.l.b16 %v731
  %v740 = vunpack.c.l.b16 %v732
  %v741 = vunpack.c.l.b16 %v733
  %v742 = vpack.c.b16 %v739, %v738
  %v743 = vpack.c.b16 %v741, %v740
  %v747 = vsel %vm623, %v729, 0
  %749 = vmatprep.subr.bf16.mxu0 0
  %750 = vmatpush1.bf16.msra.mxu0 %v742
  %751 = vmatprep.subr.bf16.mxu0 0
  %752 = vmatpush1.bf16.msra.mxu0 %v743
  %753 = vmatprep.subr.bf16.mxu0 0
  %754 = vmatpush1.bf16.msra.mxu0 0
  %755 = vmatprep.subr.bf16.mxu0 0
  %756 = vmatpush1.bf16.msra.mxu0 0
  %757 = vmatprep.subr.bf16.mxu0 0
  %758 = vmatpush1.bf16.msra.mxu0 0
  %759 = vmatprep.subr.bf16.mxu0 0
  %760 = vmatpush1.bf16.msra.mxu0 0
  %761 = vmatprep.subr.bf16.mxu0 0
  %762 = vmatpush1.bf16.msra.mxu0 0
  %763 = vmatprep.subr.bf16.mxu0 0
  %764 = vmatpush1.bf16.msra.mxu0 0
  %765 = vmatprep.subr.bf16.mxu0 0
  %766 = vmatpush1.bf16.msra.mxu0 0
  %767 = vmatprep.subr.bf16.mxu0 0
  %768 = vmatpush1.bf16.msra.mxu0 0
  %769 = vmatprep.subr.bf16.mxu0 0
  %770 = vmatpush1.bf16.msra.mxu0 0
  %771 = vmatprep.subr.bf16.mxu0 0
  %772 = vmatpush1.bf16.msra.mxu0 0
  %773 = vmatprep.subr.bf16.mxu0 0
  %774 = vmatpush1.bf16.msra.mxu0 0
  %775 = vmatprep.subr.bf16.mxu0 0
  %776 = vmatpush1.bf16.msra.mxu0 0
  %777 = vmatprep.subr.bf16.mxu0 0
  %778 = vmatpush1.bf16.msra.mxu0 0
  %779 = vmatprep.subr.bf16.mxu0 0
  %780 = vmatpush1.bf16.msra.mxu0 0
  %781 = vmatprep.mubr.bf16.mxu0 0
  %782 = vmatmul.mubr.bf16.gmra.mrb[0].mxu0 %v747
  %v783 = vpop.f32.mrb[0].mxu0
  %v784 = vadd.f32 0.0, %v783
  %v785 = vpop.f32.mrb[0].mxu0
  %v786 = vpop.f32.mrb[0].mxu0
  %v787 = vpop.f32.mrb[0].mxu0
  %788 = vdwg.mxu0
  %vm789 = vcmask 7168
  %790 = vst.msk [vmem:[%s5] sm:$0xff] %vm789, %v784
  // Predicated region
  $region22: #{tpu_custom_call.1} parent=0 // pred_check
    _
  $region23: #{tpu_custom_call.1} parent=0 // pred_check_branch
    %792 = sbr.rel (0) target = $region25
  $region24: #{tpu_custom_call.1} parent=0 // pred_region
    _
  $region25: #{tpu_custom_call.1} parent=0 // pred_fallthru
    _
  // Predicated region
  $region26: #{tpu_custom_call.1} parent=0 // pred_check
    _
  $region27: #{tpu_custom_call.1} parent=0 // pred_check_branch
    %794 = sbr.rel (0) target = $region29
  $region28: #{tpu_custom_call.1} parent=0 // pred_region
    _
  $region29: #{tpu_custom_call.1} parent=0 // pred_fallthru
    _

</llo_original>
